<compile_context>
chip_gen: v6e
topology: v6e:2x2x1
jax: 0.10.0
libtpu: 0.0.40
codegen_flags: <defaults>
</compile_context>

<pallas_src>
import jax
import jax.numpy as jnp
from jax.experimental import pallas as pl
from jax.experimental.pallas import tpu as pltpu

OUTPUT_LAYER_SIZE = 10


def _mlp_kernel(x_ref,
                w0_ref, b0_ref,
                w1_ref, b1_ref,
                w2_ref, b2_ref,
                w3_ref, b3_ref,
                w4_ref, b4_ref,
                w5_ref, b5_ref,
                out_ref):
    # x tile / w0 arrive pre-cast to bf16; MXU accumulates in f32.
    x = x_ref[...]

    # Hoist bias loads once per grid step (JAX does not CSE broadcast_in_dim).
    b0 = b0_ref[...]; b1 = b1_ref[...]; b2 = b2_ref[...]
    b3 = b3_ref[...]; b4 = b4_ref[...]; b5 = b5_ref[...]

    # fc0 (bf16 operands, f32 accumulate) + relu — the dominant matmul.
    h = jnp.maximum(
        jnp.dot(x, w0_ref[...], preferred_element_type=jnp.float32) + b0, 0.0)
    # fc1 + relu (f32).
    h = jnp.maximum(
        jnp.dot(h, w1_ref[...], preferred_element_type=jnp.float32) + b1, 0.0)
    # fc2..fc4 are tiny (<=64x10); they hide under the next x-tile DMA.
    h = jnp.maximum(
        jnp.dot(h, w2_ref[...], preferred_element_type=jnp.float32) + b2, 0.0)
    h = jnp.maximum(
        jnp.dot(h, w3_ref[...], preferred_element_type=jnp.float32) + b3, 0.0)
    h = jnp.maximum(
        jnp.dot(h, w4_ref[...], preferred_element_type=jnp.float32) + b4, 0.0)
    logits = jnp.dot(h, w5_ref[...], preferred_element_type=jnp.float32) + b5

    # log_softmax over dim=1 of the flattened (B, 10) logits (max-shifted).
    m = jnp.max(logits, axis=-1, keepdims=True)
    shifted = logits - m
    lse = jnp.log(jnp.sum(jnp.exp(shifted), axis=-1, keepdims=True))
    out_ref[...] = shifted - lse


def _round_up(n, m):
    return ((n + m - 1) // m) * m


def model_e_forward(x, params, *, tile_b=1024):
    """x: any NCHW-ish input; flattened to (-1, image_size) like the PyTorch view."""
    image_size = params["image_size"]
    # bf16 x halves the dominant HBM stream; matmul still accumulates in f32.
    x2d = x.reshape(-1, image_size).astype(jnp.bfloat16)
    B = x2d.shape[0]

    tile_b = min(tile_b, _round_up(B, 8))       # multiple of 8 sublanes
    grid = (pl.cdiv(B, tile_b),)

    args = [x2d]
    in_specs = [pl.BlockSpec((tile_b, image_size), lambda i: (i, 0))]
    for l in range(6):
        w = params[f"w{l}"]
        b = params[f"b{l}"]
        if l == 0:
            w = w.astype(jnp.bfloat16)          # bf16 operand for fc0 MXU pass
        args += [w, b]
        # Constant block index -> weights/biases stay resident across grid steps.
        in_specs += [pl.BlockSpec(w.shape, lambda i: (0, 0)),
                     pl.BlockSpec(b.shape, lambda i: (0, 0))]

    out = pl.pallas_call(
        _mlp_kernel,
        out_shape=jax.ShapeDtypeStruct((B, OUTPUT_LAYER_SIZE), jnp.float32),
        grid=grid,
        in_specs=in_specs,
        out_specs=pl.BlockSpec((tile_b, OUTPUT_LAYER_SIZE), lambda i: (i, 0)),
        compiler_params=pltpu.CompilerParams(
            dimension_semantics=("parallel",),   # megacore sharding on v7x
            vmem_limit_bytes=32 * 1024 * 1024,
        ),
    )(*args)
    return out


def init_params(key, image_size):
    """Deterministic init mirroring PyTorch Linear shapes.

    Weights stored transposed: (in_features, out_features)."""
    dims = [image_size, 128, 64, 10, 10, 10, OUTPUT_LAYER_SIZE]
    params = {"image_size": image_size}
    for i in range(6):
        fan_in, fan_out = dims[i], dims[i + 1]
        key, kw, kb = jax.random.split(key, 3)
        bound = 1.0 / jnp.sqrt(jnp.float32(fan_in))
        params[f"w{i}"] = jax.random.uniform(
            kw, (fan_in, fan_out), jnp.float32, -bound, bound)
        # bias kept 2-D (1, out) so the kernel refs are TPU-friendly
        params[f"b{i}"] = jax.random.uniform(
            kb, (1, fan_out), jnp.float32, -bound, bound)
    return params


def _reference_forward(x, params):
    """Pure-JAX reference mirroring the kernel numerics (bf16 fc0, f32 rest)."""
    image_size = params["image_size"]
    h = x.reshape(-1, image_size)
    h = jnp.dot(h.astype(jnp.bfloat16), params["w0"].astype(jnp.bfloat16),
                preferred_element_type=jnp.float32) + params["b0"]
    h = jnp.maximum(h, 0.0)
    for i in range(1, 5):
        h = jnp.maximum(h @ params[f"w{i}"] + params[f"b{i}"], 0.0)
    logits = h @ params["w5"] + params["b5"]
    return jax.nn.log_softmax(logits, axis=1)


if __name__ == "__main__":
    key = jax.random.PRNGKey(0)
    k_param, k_x = jax.random.split(key)

    # small NCHW input; image_size = C*H*W = 4*16*16 = 1024
    B, C, H, W = 2, 4, 16, 16
    image_size = C * H * W

    params = init_params(k_param, image_size)
    x = jax.random.normal(k_x, (B, C, H, W), jnp.float32)

    out = model_e_forward(x, params)
    out = jax.block_until_ready(out)

    ref = _reference_forward(x, params)
    assert out.shape == (B, OUTPUT_LAYER_SIZE)
    assert jnp.allclose(out, ref, atol=5e-4, rtol=5e-4), "mismatch vs reference"

    print("KERNEL_OK")
</pallas_src>

<mosaic_0001>
module attributes {stable_mosaic.version = 11 : i64} {
  func.func @_mlp_kernel(%arg0: i32, %arg1: memref<8x1024xbf16, #tpu.memory_space<vmem>>, %arg2: memref<1024x128xbf16, #tpu.memory_space<vmem>>, %arg3: memref<1x128xf32, #tpu.memory_space<vmem>>, %arg4: memref<128x64xf32, #tpu.memory_space<vmem>>, %arg5: memref<1x64xf32, #tpu.memory_space<vmem>>, %arg6: memref<64x10xf32, #tpu.memory_space<vmem>>, %arg7: memref<1x10xf32, #tpu.memory_space<vmem>>, %arg8: memref<10x10xf32, #tpu.memory_space<vmem>>, %arg9: memref<1x10xf32, #tpu.memory_space<vmem>>, %arg10: memref<10x10xf32, #tpu.memory_space<vmem>>, %arg11: memref<1x10xf32, #tpu.memory_space<vmem>>, %arg12: memref<10x10xf32, #tpu.memory_space<vmem>>, %arg13: memref<1x10xf32, #tpu.memory_space<vmem>>, %arg14: memref<8x10xf32, #tpu.memory_space<vmem>>) attributes {dimension_semantics = [#tpu.dimension_semantics<parallel>], iteration_bounds = array<i64: 1>, scalar_prefetch = 0 : i64, scratch_operands = 0 : i64, tpu.core_type = #tpu.core_type<tc>, window_params = [{transform_indices = @transform_0, window_bounds = array<i64: 8, 1024>}, {pipeline_mode = #tpu.pipeline_mode<synchronous>, transform_indices = @transform_1, window_bounds = array<i64: 1024, 128>}, {pipeline_mode = #tpu.pipeline_mode<synchronous>, transform_indices = @transform_2, window_bounds = array<i64: 1, 128>}, {pipeline_mode = #tpu.pipeline_mode<synchronous>, transform_indices = @transform_3, window_bounds = array<i64: 128, 64>}, {pipeline_mode = #tpu.pipeline_mode<synchronous>, transform_indices = @transform_4, window_bounds = array<i64: 1, 64>}, {pipeline_mode = #tpu.pipeline_mode<synchronous>, transform_indices = @transform_5, window_bounds = array<i64: 64, 10>}, {pipeline_mode = #tpu.pipeline_mode<synchronous>, transform_indices = @transform_6, window_bounds = array<i64: 1, 10>}, {pipeline_mode = #tpu.pipeline_mode<synchronous>, transform_indices = @transform_7, window_bounds = array<i64: 10, 10>}, {pipeline_mode = #tpu.pipeline_mode<synchronous>, transform_indices = @transform_8, window_bounds = array<i64: 1, 10>}, {pipeline_mode = #tpu.pipeline_mode<synchronous>, transform_indices = @transform_9, window_bounds = array<i64: 10, 10>}, {pipeline_mode = #tpu.pipeline_mode<synchronous>, transform_indices = @transform_10, window_bounds = array<i64: 1, 10>}, {pipeline_mode = #tpu.pipeline_mode<synchronous>, transform_indices = @transform_11, window_bounds = array<i64: 10, 10>}, {pipeline_mode = #tpu.pipeline_mode<synchronous>, transform_indices = @transform_12, window_bounds = array<i64: 1, 10>}, {transform_indices = @transform_13, window_bounds = array<i64: 8, 10>}]} {
    %c0 = arith.constant 0 : index
    %c0_0 = arith.constant 0 : index
    %0 = vector.load %arg1[%c0, %c0_0] : memref<8x1024xbf16, #tpu.memory_space<vmem>>, vector<8x1024xbf16>
    %c0_1 = arith.constant 0 : index
    %c0_2 = arith.constant 0 : index
    %1 = vector.load %arg3[%c0_1, %c0_2] : memref<1x128xf32, #tpu.memory_space<vmem>>, vector<1x128xf32>
    %c0_3 = arith.constant 0 : index
    %c0_4 = arith.constant 0 : index
    %2 = vector.load %arg5[%c0_3, %c0_4] : memref<1x64xf32, #tpu.memory_space<vmem>>, vector<1x64xf32>
    %c0_5 = arith.constant 0 : index
    %c0_6 = arith.constant 0 : index
    %3 = vector.load %arg7[%c0_5, %c0_6] : memref<1x10xf32, #tpu.memory_space<vmem>>, vector<1x10xf32>
    %c0_7 = arith.constant 0 : index
    %c0_8 = arith.constant 0 : index
    %4 = vector.load %arg9[%c0_7, %c0_8] : memref<1x10xf32, #tpu.memory_space<vmem>>, vector<1x10xf32>
    %c0_9 = arith.constant 0 : index
    %c0_10 = arith.constant 0 : index
    %5 = vector.load %arg11[%c0_9, %c0_10] : memref<1x10xf32, #tpu.memory_space<vmem>>, vector<1x10xf32>
    %c0_11 = arith.constant 0 : index
    %c0_12 = arith.constant 0 : index
    %6 = vector.load %arg13[%c0_11, %c0_12] : memref<1x10xf32, #tpu.memory_space<vmem>>, vector<1x10xf32>
    %c0_13 = arith.constant 0 : index
    %c0_14 = arith.constant 0 : index
    %7 = vector.load %arg2[%c0_13, %c0_14] : memref<1024x128xbf16, #tpu.memory_space<vmem>>, vector<1024x128xbf16>
    %cst = arith.constant dense<0.000000e+00> : vector<8x128xf32>
    %8 = tpu.matmul %0, %7, %cst {dimension_numbers = #tpu.dot_dimension_numbers<[1], [0], [0], [1], [0, 0, 1, 1], [], []>} : vector<8x1024xbf16>, vector<1024x128xbf16>, vector<8x128xf32> -> vector<8x128xf32>
    %9 = vector.broadcast %1 : vector<1x128xf32> to vector<8x128xf32>
    %10 = arith.addf %8, %9 : vector<8x128xf32>
    %cst_15 = arith.constant 0.000000e+00 : f32
    %11 = vector.broadcast %cst_15 : f32 to vector<8x128xf32>
    %12 = arith.maximumf %10, %11 : vector<8x128xf32>
    %c0_16 = arith.constant 0 : index
    %c0_17 = arith.constant 0 : index
    %13 = vector.load %arg4[%c0_16, %c0_17] : memref<128x64xf32, #tpu.memory_space<vmem>>, vector<128x64xf32>
    %cst_18 = arith.constant dense<0.000000e+00> : vector<8x64xf32>
    %14 = tpu.matmul %12, %13, %cst_18 {dimension_numbers = #tpu.dot_dimension_numbers<[1], [0], [0], [1], [0, 0, 1, 1], [], []>} : vector<8x128xf32>, vector<128x64xf32>, vector<8x64xf32> -> vector<8x64xf32>
    %15 = vector.broadcast %2 : vector<1x64xf32> to vector<8x64xf32>
    %16 = arith.addf %14, %15 : vector<8x64xf32>
    %cst_19 = arith.constant 0.000000e+00 : f32
    %17 = vector.broadcast %cst_19 : f32 to vector<8x64xf32>
    %18 = arith.maximumf %16, %17 : vector<8x64xf32>
    %c0_20 = arith.constant 0 : index
    %c0_21 = arith.constant 0 : index
    %19 = vector.load %arg6[%c0_20, %c0_21] : memref<64x10xf32, #tpu.memory_space<vmem>>, vector<64x10xf32>
    %cst_22 = arith.constant dense<0.000000e+00> : vector<8x10xf32>
    %20 = tpu.matmul %18, %19, %cst_22 {dimension_numbers = #tpu.dot_dimension_numbers<[1], [0], [0], [1], [0, 0, 1, 1], [], []>} : vector<8x64xf32>, vector<64x10xf32>, vector<8x10xf32> -> vector<8x10xf32>
    %21 = vector.broadcast %3 : vector<1x10xf32> to vector<8x10xf32>
    %22 = arith.addf %20, %21 : vector<8x10xf32>
    %cst_23 = arith.constant 0.000000e+00 : f32
    %23 = vector.broadcast %cst_23 : f32 to vector<8x10xf32>
    %24 = arith.maximumf %22, %23 : vector<8x10xf32>
    %c0_24 = arith.constant 0 : index
    %c0_25 = arith.constant 0 : index
    %25 = vector.load %arg8[%c0_24, %c0_25] : memref<10x10xf32, #tpu.memory_space<vmem>>, vector<10x10xf32>
    %cst_26 = arith.constant dense<0.000000e+00> : vector<8x10xf32>
    %26 = tpu.matmul %24, %25, %cst_26 {dimension_numbers = #tpu.dot_dimension_numbers<[1], [0], [0], [1], [0, 0, 1, 1], [], []>} : vector<8x10xf32>, vector<10x10xf32>, vector<8x10xf32> -> vector<8x10xf32>
    %27 = vector.broadcast %4 : vector<1x10xf32> to vector<8x10xf32>
    %28 = arith.addf %26, %27 : vector<8x10xf32>
    %cst_27 = arith.constant 0.000000e+00 : f32
    %29 = vector.broadcast %cst_27 : f32 to vector<8x10xf32>
    %30 = arith.maximumf %28, %29 : vector<8x10xf32>
    %c0_28 = arith.constant 0 : index
    %c0_29 = arith.constant 0 : index
    %31 = vector.load %arg10[%c0_28, %c0_29] : memref<10x10xf32, #tpu.memory_space<vmem>>, vector<10x10xf32>
    %cst_30 = arith.constant dense<0.000000e+00> : vector<8x10xf32>
    %32 = tpu.matmul %30, %31, %cst_30 {dimension_numbers = #tpu.dot_dimension_numbers<[1], [0], [0], [1], [0, 0, 1, 1], [], []>} : vector<8x10xf32>, vector<10x10xf32>, vector<8x10xf32> -> vector<8x10xf32>
    %33 = vector.broadcast %5 : vector<1x10xf32> to vector<8x10xf32>
    %34 = arith.addf %32, %33 : vector<8x10xf32>
    %cst_31 = arith.constant 0.000000e+00 : f32
    %35 = vector.broadcast %cst_31 : f32 to vector<8x10xf32>
    %36 = arith.maximumf %34, %35 : vector<8x10xf32>
    %c0_32 = arith.constant 0 : index
    %c0_33 = arith.constant 0 : index
    %37 = vector.load %arg12[%c0_32, %c0_33] : memref<10x10xf32, #tpu.memory_space<vmem>>, vector<10x10xf32>
    %cst_34 = arith.constant dense<0.000000e+00> : vector<8x10xf32>
    %38 = tpu.matmul %36, %37, %cst_34 {dimension_numbers = #tpu.dot_dimension_numbers<[1], [0], [0], [1], [0, 0, 1, 1], [], []>} : vector<8x10xf32>, vector<10x10xf32>, vector<8x10xf32> -> vector<8x10xf32>
    %39 = vector.broadcast %6 : vector<1x10xf32> to vector<8x10xf32>
    %40 = arith.addf %38, %39 : vector<8x10xf32>
    %cst_35 = arith.constant dense<0xFF800000> : vector<8xf32>
    %41 = vector.multi_reduction <maximumf>, %40, %cst_35 [1] : vector<8x10xf32> to vector<8xf32>
    %42 = vector.shape_cast %41 : vector<8xf32> to vector<8x1xf32>
    %43 = vector.broadcast %42 : vector<8x1xf32> to vector<8x10xf32>
    %44 = arith.subf %40, %43 : vector<8x10xf32>
    %45 = math.exp %44 : vector<8x10xf32>
    %cst_36 = arith.constant dense<0.000000e+00> : vector<8xf32>
    %46 = vector.multi_reduction <add>, %45, %cst_36 [1] : vector<8x10xf32> to vector<8xf32>
    %47 = vector.shape_cast %46 : vector<8xf32> to vector<8x1xf32>
    %48 = math.log %47 : vector<8x1xf32>
    %49 = vector.broadcast %48 : vector<8x1xf32> to vector<8x10xf32>
    %50 = arith.subf %44, %49 : vector<8x10xf32>
    %c0_37 = arith.constant 0 : index
    %c0_38 = arith.constant 0 : index
    %51 = vector.load %arg14[%c0_37, %c0_38] : memref<8x10xf32, #tpu.memory_space<vmem>>, vector<8x10xf32>
    tpu.vector_store %arg14[%c0_37, %c0_38], %50 {strides = array<i32>} : memref<8x10xf32, #tpu.memory_space<vmem>>, vector<8x10xf32>,
    return
  }
  func.func @transform_0(%arg0: i32) -> (i32, i32) {
    %c0_i32 = arith.constant 0 : i32
    %c0_i32_0 = arith.constant 0 : i32
    return %arg0, %c0_i32 : i32, i32
  }
  func.func @transform_1(%arg0: i32) -> (i32, i32) {
    %c0_i32 = arith.constant 0 : i32
    %c0_i32_0 = arith.constant 0 : i32
    %c0_i32_1 = arith.constant 0 : i32
    return %c0_i32, %c0_i32_0 : i32, i32
  }
  func.func @transform_2(%arg0: i32) -> (i32, i32) {
    %c0_i32 = arith.constant 0 : i32
    %c0_i32_0 = arith.constant 0 : i32
    %c0_i32_1 = arith.constant 0 : i32
    return %c0_i32, %c0_i32_0 : i32, i32
  }
  func.func @transform_3(%arg0: i32) -> (i32, i32) {
    %c0_i32 = arith.constant 0 : i32
    %c0_i32_0 = arith.constant 0 : i32
    %c0_i32_1 = arith.constant 0 : i32
    return %c0_i32, %c0_i32_0 : i32, i32
  }
  func.func @transform_4(%arg0: i32) -> (i32, i32) {
    %c0_i32 = arith.constant 0 : i32
    %c0_i32_0 = arith.constant 0 : i32
    %c0_i32_1 = arith.constant 0 : i32
    return %c0_i32, %c0_i32_0 : i32, i32
  }
  func.func @transform_5(%arg0: i32) -> (i32, i32) {
    %c0_i32 = arith.constant 0 : i32
    %c0_i32_0 = arith.constant 0 : i32
    %c0_i32_1 = arith.constant 0 : i32
    return %c0_i32, %c0_i32_0 : i32, i32
  }
  func.func @transform_6(%arg0: i32) -> (i32, i32) {
    %c0_i32 = arith.constant 0 : i32
    %c0_i32_0 = arith.constant 0 : i32
    %c0_i32_1 = arith.constant 0 : i32
    return %c0_i32, %c0_i32_0 : i32, i32
  }
  func.func @transform_7(%arg0: i32) -> (i32, i32) {
    %c0_i32 = arith.constant 0 : i32
    %c0_i32_0 = arith.constant 0 : i32
    %c0_i32_1 = arith.constant 0 : i32
    return %c0_i32, %c0_i32_0 : i32, i32
  }
  func.func @transform_8(%arg0: i32) -> (i32, i32) {
    %c0_i32 = arith.constant 0 : i32
    %c0_i32_0 = arith.constant 0 : i32
    %c0_i32_1 = arith.constant 0 : i32
    return %c0_i32, %c0_i32_0 : i32, i32
  }
  func.func @transform_9(%arg0: i32) -> (i32, i32) {
    %c0_i32 = arith.constant 0 : i32
    %c0_i32_0 = arith.constant 0 : i32
    %c0_i32_1 = arith.constant 0 : i32
    return %c0_i32, %c0_i32_0 : i32, i32
  }
  func.func @transform_10(%arg0: i32) -> (i32, i32) {
    %c0_i32 = arith.constant 0 : i32
    %c0_i32_0 = arith.constant 0 : i32
    %c0_i32_1 = arith.constant 0 : i32
    return %c0_i32, %c0_i32_0 : i32, i32
  }
  func.func @transform_11(%arg0: i32) -> (i32, i32) {
    %c0_i32 = arith.constant 0 : i32
    %c0_i32_0 = arith.constant 0 : i32
    %c0_i32_1 = arith.constant 0 : i32
    return %c0_i32, %c0_i32_0 : i32, i32
  }
  func.func @transform_12(%arg0: i32) -> (i32, i32) {
    %c0_i32 = arith.constant 0 : i32
    %c0_i32_0 = arith.constant 0 : i32
    %c0_i32_1 = arith.constant 0 : i32
    return %c0_i32, %c0_i32_0 : i32, i32
  }
  func.func @transform_13(%arg0: i32) -> (i32, i32) {
    %c0_i32 = arith.constant 0 : i32
    %c0_i32_0 = arith.constant 0 : i32
    return %arg0, %c0_i32 : i32, i32
  }
}

</mosaic_0001>

<llo_original>
// kernel: tpu_custom_call.1
$region0: #{tpu_custom_call.1}
  #allocation0 [shape = 'u32[]', space=smem, size = 0x4, offset = 0x4, fixed_abs, tag = 'smem constant byte address 0x4 - core index']
  #allocation1 [shape = 'u32[144,128]{1,0:T(1,128)}', space=vmem, size = 0x12000, scoped, tag = 'internal scratch']
  %s0 = inlined_call_operand.vmem [shape: bf16[2,1024], index: 0, kind: input, shape index: {}]
  %s1 = inlined_call_operand.hbm [shape: bf16[1024,128], index: 1, kind: input, shape index: {}]
  %s2 = inlined_call_operand.vmem [shape: f32[1,128], index: 2, kind: input, shape index: {}]
  %s3 = inlined_call_operand.vmem [shape: f32[128,64], index: 3, kind: input, shape index: {}]
  %s4 = inlined_call_operand.vmem [shape: f32[1,64], index: 4, kind: input, shape index: {}]
  %s5 = inlined_call_operand.vmem [shape: f32[64,10], index: 5, kind: input, shape index: {}]
  %s6 = inlined_call_operand.vmem [shape: f32[1,10], index: 6, kind: input, shape index: {}]
  %s7 = inlined_call_operand.vmem [shape: f32[10,10], index: 7, kind: input, shape index: {}]
  %s8 = inlined_call_operand.vmem [shape: f32[1,10], index: 8, kind: input, shape index: {}]
  %s9 = inlined_call_operand.vmem [shape: f32[10,10], index: 9, kind: input, shape index: {}]
  %s10 = inlined_call_operand.vmem [shape: f32[1,10], index: 10, kind: input, shape index: {}]
  %s11 = inlined_call_operand.vmem [shape: f32[10,10], index: 11, kind: input, shape index: {}]
  %s12 = inlined_call_operand.vmem [shape: f32[1,10], index: 12, kind: input, shape index: {}]
  %s13 = inlined_call_operand.hbm [shape: f32[2,10], index: 13, kind: output, shape index: {}]
  %s14 = sld [smem:[#allocation0]]
  $region66: #{tpu_custom_call.1} parent=0
    _
  %s16 = ssub.s32 1, %s14
  %s17 = scalar_select 0, %s16, %s14
  $region1: #{tpu_custom_call.1} parent=0
    #allocation2 [shape = 'u8[262144]{0}', space=vmem, size = 0x40000, scoped, tag = 'input window, operand 1, single buffered']
    #allocation3 [shape = 's32[1]{0}', space=sflag, size = 0x4, scoped, tag = 'scoped memory for tpu_custom_call.1']
    #allocation4 [shape = 's32[1]{0}', space=sflag, size = 0x4, scoped, tag = 'scoped memory for tpu_custom_call.1']
    #allocation5 [shape = 'u8[4096]{0}', space=vmem, size = 0x1000, scoped, tag = 'output window, operand 0, single buffered']
    %18 = vsyncpa [#allocation3], 0
    %19 = vsyncpa [#allocation4], 0
    // Predicated region
    $region2: #{tpu_custom_call.1} parent=1 // pred_check
      _
    $region3: #{tpu_custom_call.1} parent=1 // pred_check_branch
      %21 = sbr.rel (0) target = $region5
    $region4: #{tpu_custom_call.1} parent=1 // pred_region
      _
    $region5: #{tpu_custom_call.1} parent=1 // pred_fallthru
      _
    // Predicated region
    $region6: #{tpu_custom_call.1} parent=1 // pred_check
      _
    $region7: #{tpu_custom_call.1} parent=1 // pred_check_branch
      %23 = sbr.rel (0) target = $region9
    $region8: #{tpu_custom_call.1} parent=1 // pred_region
      %s25 = ssub.s32 8192, 8192
      %26 = vsyncadd [#allocation3], %s25
      %s27 = sshll.u32 [#allocation2], 4
      %s28 = int_to_ptr.vmem [resolvable:$true] %s27
      %33 = dma.hbm_to_vmem [thread:$0]  %s1, 8192, %s28, [#allocation3], 64, 64, 4
    $region9: #{tpu_custom_call.1} parent=1 // pred_fallthru
      _
    // Predicated region
    $region10: #{tpu_custom_call.1} parent=1 // pred_check
      _
    $region11: #{tpu_custom_call.1} parent=1 // pred_check_branch
      %35 = sbr.rel (0) target = $region13
    $region12: #{tpu_custom_call.1} parent=1 // pred_region
      _
    $region13: #{tpu_custom_call.1} parent=1 // pred_fallthru
      _
    // Predicated region
    $region14: #{tpu_custom_call.1} parent=1 // pred_check
      _
    $region15: #{tpu_custom_call.1} parent=1 // pred_check_branch
      %37 = sbr.rel (0) target = $region17
    $region16: #{tpu_custom_call.1} parent=1 // pred_region
      _
    $region17: #{tpu_custom_call.1} parent=1 // pred_fallthru
      _
    // Predicated region
    $region18: #{tpu_custom_call.1} parent=1 // pred_check
      _
    $region19: #{tpu_custom_call.1} parent=1 // pred_check_branch
      %39 = sbr.rel (0) target = $region21
    $region20: #{tpu_custom_call.1} parent=1 // pred_region
      _
    $region21: #{tpu_custom_call.1} parent=1 // pred_fallthru
      _
    // Predicated region
    $region22: #{tpu_custom_call.1} parent=1 // pred_check
      _
    $region23: #{tpu_custom_call.1} parent=1 // pred_check_branch
      %41 = sbr.rel (0) target = $region25
    $region24: #{tpu_custom_call.1} parent=1 // pred_region
      _
    $region25: #{tpu_custom_call.1} parent=1 // pred_fallthru
      _
    // Predicated region
    $region26: #{tpu_custom_call.1} parent=1 // pred_check
      _
    $region27: #{tpu_custom_call.1} parent=1 // pred_check_branch
      %43 = sbr.rel (0) target = $region29
    $region28: #{tpu_custom_call.1} parent=1 // pred_region
      _
    $region29: #{tpu_custom_call.1} parent=1 // pred_fallthru
      _
    // Predicated region
    $region30: #{tpu_custom_call.1} parent=1 // pred_check
      _
    $region31: #{tpu_custom_call.1} parent=1 // pred_check_branch
      %45 = sbr.rel (0) target = $region33
    $region32: #{tpu_custom_call.1} parent=1 // pred_region
      _
    $region33: #{tpu_custom_call.1} parent=1 // pred_fallthru
      _
    // Predicated region
    $region34: #{tpu_custom_call.1} parent=1 // pred_check
      _
    $region35: #{tpu_custom_call.1} parent=1 // pred_check_branch
      %47 = sbr.rel (0) target = $region37
    $region36: #{tpu_custom_call.1} parent=1 // pred_region
      _
    $region37: #{tpu_custom_call.1} parent=1 // pred_fallthru
      _
    // Predicated region
    $region38: #{tpu_custom_call.1} parent=1 // pred_check
      _
    $region39: #{tpu_custom_call.1} parent=1 // pred_check_branch
      %49 = sbr.rel (0) target = $region41
    $region40: #{tpu_custom_call.1} parent=1 // pred_region
      _
    $region41: #{tpu_custom_call.1} parent=1 // pred_fallthru
      _
    // Predicated region
    $region42: #{tpu_custom_call.1} parent=1 // pred_check
      _
    $region43: #{tpu_custom_call.1} parent=1 // pred_check_branch
      %51 = sbr.rel (0) target = $region45
    $region44: #{tpu_custom_call.1} parent=1 // pred_region
      _
    $region45: #{tpu_custom_call.1} parent=1 // pred_fallthru
      _
    // Predicated region
    $region46: #{tpu_custom_call.1} parent=1 // pred_check
      _
    $region47: #{tpu_custom_call.1} parent=1 // pred_check_branch
      %53 = sbr.rel (0) target = $region49
    $region48: #{tpu_custom_call.1} parent=1 // pred_region
      _
    $region49: #{tpu_custom_call.1} parent=1 // pred_fallthru
      _
    // Predicated region
    $region50: #{tpu_custom_call.1} parent=1 // pred_check
      _
    $region51: #{tpu_custom_call.1} parent=1 // pred_check_branch
      %55 = sbr.rel (0) target = $region53
    $region52: #{tpu_custom_call.1} parent=1 // pred_region
      _
    $region53: #{tpu_custom_call.1} parent=1 // pred_fallthru
      _
    // Predicated region
    $region54: #{tpu_custom_call.1} parent=1 // pred_check
      _
    $region55: #{tpu_custom_call.1} parent=1 // pred_check_branch
      %57 = sbr.rel (0) target = $region57
    $region56: #{tpu_custom_call.1} parent=1 // pred_region
      %58 = dma.done [#allocation3], 8192
    $region57: #{tpu_custom_call.1} parent=1 // pred_fallthru
      _
    %v60 = vld [vmem:[%s0] sm:$0xff]
    %v61 = vld [vmem:[%s0 + $0x8] sm:$0xff]
    %v62 = vld [vmem:[%s0 + $0x10] sm:$0xff]
    %v63 = vld [vmem:[%s0 + $0x18] sm:$0xff]
    %v64 = vld [vmem:[%s2] sm:$0x1]
    %v65 = vld [vmem:[%s4] sm:$0x1]
    %v66 = vld [vmem:[%s6] sm:$0x1]
    %v67 = vld [vmem:[%s8] sm:$0x1]
    %v68 = vld [vmem:[%s10] sm:$0x1]
    %v69 = vld [vmem:[%s12] sm:$0x1]
    %v70 = vld [vmem:[#allocation2] sm:$0xf]
    %v71 = vld [vmem:[#allocation2 + $0x4] sm:$0xf]
    %v72 = vld [vmem:[#allocation2 + $0x8] sm:$0xf]
    %v73 = vld [vmem:[#allocation2 + $0xc] sm:$0xf]
    %v74 = vld [vmem:[#allocation2 + $0x10] sm:$0xf]
    %v75 = vld [vmem:[#allocation2 + $0x14] sm:$0xf]
    %v76 = vld [vmem:[#allocation2 + $0x18] sm:$0xf]
    %v77 = vld [vmem:[#allocation2 + $0x1c] sm:$0xf]
    %v78 = vld [vmem:[#allocation2 + $0x20] sm:$0xf]
    %v79 = vld [vmem:[#allocation2 + $0x24] sm:$0xf]
    %v80 = vld [vmem:[#allocation2 + $0x28] sm:$0xf]
    %v81 = vld [vmem:[#allocation2 + $0x2c] sm:$0xf]
    %v82 = vld [vmem:[#allocation2 + $0x30] sm:$0xf]
    %v83 = vld [vmem:[#allocation2 + $0x34] sm:$0xf]
    %v84 = vld [vmem:[#allocation2 + $0x38] sm:$0xf]
    %v85 = vld [vmem:[#allocation2 + $0x3c] sm:$0xf]
    %v86 = vld [vmem:[#allocation2 + $0x40] sm:$0xf]
    %v87 = vld [vmem:[#allocation2 + $0x44] sm:$0xf]
    %v88 = vld [vmem:[#allocation2 + $0x48] sm:$0xf]
    %v89 = vld [vmem:[#allocation2 + $0x4c] sm:$0xf]
    %v90 = vld [vmem:[#allocation2 + $0x50] sm:$0xf]
    %v91 = vld [vmem:[#allocation2 + $0x54] sm:$0xf]
    %v92 = vld [vmem:[#allocation2 + $0x58] sm:$0xf]
    %v93 = vld [vmem:[#allocation2 + $0x5c] sm:$0xf]
    %v94 = vld [vmem:[#allocation2 + $0x60] sm:$0xf]
    %v95 = vld [vmem:[#allocation2 + $0x64] sm:$0xf]
    %v96 = vld [vmem:[#allocation2 + $0x68] sm:$0xf]
    %v97 = vld [vmem:[#allocation2 + $0x6c] sm:$0xf]
    %v98 = vld [vmem:[#allocation2 + $0x70] sm:$0xf]
    %v99 = vld [vmem:[#allocation2 + $0x74] sm:$0xf]
    %v100 = vld [vmem:[#allocation2 + $0x78] sm:$0xf]
    %v101 = vld [vmem:[#allocation2 + $0x7c] sm:$0xf]
    %v102 = vld [vmem:[#allocation2 + $0x80] sm:$0xf]
    %v103 = vld [vmem:[#allocation2 + $0x84] sm:$0xf]
    %v104 = vld [vmem:[#allocation2 + $0x88] sm:$0xf]
    %v105 = vld [vmem:[#allocation2 + $0x8c] sm:$0xf]
    %v106 = vld [vmem:[#allocation2 + $0x90] sm:$0xf]
    %v107 = vld [vmem:[#allocation2 + $0x94] sm:$0xf]
    %v108 = vld [vmem:[#allocation2 + $0x98] sm:$0xf]
    %v109 = vld [vmem:[#allocation2 + $0x9c] sm:$0xf]
    %v110 = vld [vmem:[#allocation2 + $0xa0] sm:$0xf]
    %v111 = vld [vmem:[#allocation2 + $0xa4] sm:$0xf]
    %v112 = vld [vmem:[#allocation2 + $0xa8] sm:$0xf]
    %v113 = vld [vmem:[#allocation2 + $0xac] sm:$0xf]
    %v114 = vld [vmem:[#allocation2 + $0xb0] sm:$0xf]
    %v115 = vld [vmem:[#allocation2 + $0xb4] sm:$0xf]
    %v116 = vld [vmem:[#allocation2 + $0xb8] sm:$0xf]
    %v117 = vld [vmem:[#allocation2 + $0xbc] sm:$0xf]
    %v118 = vld [vmem:[#allocation2 + $0xc0] sm:$0xf]
    %v119 = vld [vmem:[#allocation2 + $0xc4] sm:$0xf]
    %v120 = vld [vmem:[#allocation2 + $0xc8] sm:$0xf]
    %v121 = vld [vmem:[#allocation2 + $0xcc] sm:$0xf]
    %v122 = vld [vmem:[#allocation2 + $0xd0] sm:$0xf]
    %v123 = vld [vmem:[#allocation2 + $0xd4] sm:$0xf]
    %v124 = vld [vmem:[#allocation2 + $0xd8] sm:$0xf]
    %v125 = vld [vmem:[#allocation2 + $0xdc] sm:$0xf]
    %v126 = vld [vmem:[#allocation2 + $0xe0] sm:$0xf]
    %v127 = vld [vmem:[#allocation2 + $0xe4] sm:$0xf]
    %v128 = vld [vmem:[#allocation2 + $0xe8] sm:$0xf]
    %v129 = vld [vmem:[#allocation2 + $0xec] sm:$0xf]
    %v130 = vld [vmem:[#allocation2 + $0xf0] sm:$0xf]
    %v131 = vld [vmem:[#allocation2 + $0xf4] sm:$0xf]
    %v132 = vld [vmem:[#allocation2 + $0xf8] sm:$0xf]
    %v133 = vld [vmem:[#allocation2 + $0xfc] sm:$0xf]
    %v134 = vld [vmem:[#allocation2 + $0x100] sm:$0xf]
    %v135 = vld [vmem:[#allocation2 + $0x104] sm:$0xf]
    %v136 = vld [vmem:[#allocation2 + $0x108] sm:$0xf]
    %v137 = vld [vmem:[#allocation2 + $0x10c] sm:$0xf]
    %v138 = vld [vmem:[#allocation2 + $0x110] sm:$0xf]
    %v139 = vld [vmem:[#allocation2 + $0x114] sm:$0xf]
    %v140 = vld [vmem:[#allocation2 + $0x118] sm:$0xf]
    %v141 = vld [vmem:[#allocation2 + $0x11c] sm:$0xf]
    %v142 = vld [vmem:[#allocation2 + $0x120] sm:$0xf]
    %v143 = vld [vmem:[#allocation2 + $0x124] sm:$0xf]
    %v144 = vld [vmem:[#allocation2 + $0x128] sm:$0xf]
    %v145 = vld [vmem:[#allocation2 + $0x12c] sm:$0xf]
    %v146 = vld [vmem:[#allocation2 + $0x130] sm:$0xf]
    %v147 = vld [vmem:[#allocation2 + $0x134] sm:$0xf]
    %v148 = vld [vmem:[#allocation2 + $0x138] sm:$0xf]
    %v149 = vld [vmem:[#allocation2 + $0x13c] sm:$0xf]
    %v150 = vld [vmem:[#allocation2 + $0x140] sm:$0xf]
    %v151 = vld [vmem:[#allocation2 + $0x144] sm:$0xf]
    %v152 = vld [vmem:[#allocation2 + $0x148] sm:$0xf]
    %v153 = vld [vmem:[#allocation2 + $0x14c] sm:$0xf]
    %v154 = vld [vmem:[#allocation2 + $0x150] sm:$0xf]
    %v155 = vld [vmem:[#allocation2 + $0x154] sm:$0xf]
    %v156 = vld [vmem:[#allocation2 + $0x158] sm:$0xf]
    %v157 = vld [vmem:[#allocation2 + $0x15c] sm:$0xf]
    %v158 = vld [vmem:[#allocation2 + $0x160] sm:$0xf]
    %v159 = vld [vmem:[#allocation2 + $0x164] sm:$0xf]
    %v160 = vld [vmem:[#allocation2 + $0x168] sm:$0xf]
    %v161 = vld [vmem:[#allocation2 + $0x16c] sm:$0xf]
    %v162 = vld [vmem:[#allocation2 + $0x170] sm:$0xf]
    %v163 = vld [vmem:[#allocation2 + $0x174] sm:$0xf]
    %v164 = vld [vmem:[#allocation2 + $0x178] sm:$0xf]
    %v165 = vld [vmem:[#allocation2 + $0x17c] sm:$0xf]
    %v166 = vld [vmem:[#allocation2 + $0x180] sm:$0xf]
    %v167 = vld [vmem:[#allocation2 + $0x184] sm:$0xf]
    %v168 = vld [vmem:[#allocation2 + $0x188] sm:$0xf]
    %v169 = vld [vmem:[#allocation2 + $0x18c] sm:$0xf]
    %v170 = vld [vmem:[#allocation2 + $0x190] sm:$0xf]
    %v171 = vld [vmem:[#allocation2 + $0x194] sm:$0xf]
    %v172 = vld [vmem:[#allocation2 + $0x198] sm:$0xf]
    %v173 = vld [vmem:[#allocation2 + $0x19c] sm:$0xf]
    %v174 = vld [vmem:[#allocation2 + $0x1a0] sm:$0xf]
    %v175 = vld [vmem:[#allocation2 + $0x1a4] sm:$0xf]
    %v176 = vld [vmem:[#allocation2 + $0x1a8] sm:$0xf]
    %v177 = vld [vmem:[#allocation2 + $0x1ac] sm:$0xf]
    %v178 = vld [vmem:[#allocation2 + $0x1b0] sm:$0xf]
    %v179 = vld [vmem:[#allocation2 + $0x1b4] sm:$0xf]
    %v180 = vld [vmem:[#allocation2 + $0x1b8] sm:$0xf]
    %v181 = vld [vmem:[#allocation2 + $0x1bc] sm:$0xf]
    %v182 = vld [vmem:[#allocation2 + $0x1c0] sm:$0xf]
    %v183 = vld [vmem:[#allocation2 + $0x1c4] sm:$0xf]
    %v184 = vld [vmem:[#allocation2 + $0x1c8] sm:$0xf]
    %v185 = vld [vmem:[#allocation2 + $0x1cc] sm:$0xf]
    %v186 = vld [vmem:[#allocation2 + $0x1d0] sm:$0xf]
    %v187 = vld [vmem:[#allocation2 + $0x1d4] sm:$0xf]
    %v188 = vld [vmem:[#allocation2 + $0x1d8] sm:$0xf]
    %v189 = vld [vmem:[#allocation2 + $0x1dc] sm:$0xf]
    %v190 = vld [vmem:[#allocation2 + $0x1e0] sm:$0xf]
    %v191 = vld [vmem:[#allocation2 + $0x1e4] sm:$0xf]
    %v192 = vld [vmem:[#allocation2 + $0x1e8] sm:$0xf]
    %v193 = vld [vmem:[#allocation2 + $0x1ec] sm:$0xf]
    %v194 = vld [vmem:[#allocation2 + $0x1f0] sm:$0xf]
    %v195 = vld [vmem:[#allocation2 + $0x1f4] sm:$0xf]
    %v196 = vld [vmem:[#allocation2 + $0x1f8] sm:$0xf]
    %v197 = vld [vmem:[#allocation2 + $0x1fc] sm:$0xf]
    %v199 = vlaneseq
    %v200 = vshrl.u32 %v199, 7
    %v201 = vsub.s32 0, %v200
    %v202 = vrot.slane %v64, %v201
    %v208 = vcombine.low %v60, %v61
    %v209 = vcombine.high %v60, %v61
    %v210 = vcombine.low %v62, %v63
    %v211 = vcombine.high %v62, %v63
    %v213 = vunpack.c.l.s4 1966171168
    %v214 = vunpack.c.0.s8 %v213
    %v215 = vlaneseq
    %v216 = vshrl.u32 %v215, 7
    %v217 = vsub.s32 %v214, %v216
    %v218 = vrot.slane %v208, %v217
    %v220 = vunpack.c.l.s4 1966171168
    %v221 = vunpack.c.0.s8 %v220
    %v222 = vlaneseq
    %v223 = vshrl.u32 %v222, 7
    %v224 = vsub.s32 %v221, %v223
    %v225 = vrot.slane %v209, %v224
    %v227 = vunpack.c.l.s4 1966171168
    %v228 = vunpack.c.0.s8 %v227
    %v229 = vlaneseq
    %v230 = vshrl.u32 %v229, 7
    %v231 = vsub.s32 %v228, %v230
    %v232 = vrot.slane %v210, %v231
    %v234 = vunpack.c.l.s4 1966171168
    %v235 = vunpack.c.0.s8 %v234
    %v236 = vlaneseq
    %v237 = vshrl.u32 %v236, 7
    %v238 = vsub.s32 %v235, %v237
    %v239 = vrot.slane %v211, %v238
    %v240 = vcombine.low %v218, %v232
    %v241 = vcombine.high %v218, %v232
    %v242 = vcombine.low %v225, %v239
    %v243 = vcombine.high %v225, %v239
    %v245 = vunpack.c.l.s4 1966171168
    %v246 = vunpack.c.0.s8 %v245
    %v247 = vlaneseq
    %v248 = vshrl.u32 %v247, 7
    %v249 = vsub.s32 %v246, %v248
    %v250 = vrot.slane %v240, %v249
    %v252 = vunpack.c.l.s4 1966171168
    %v253 = vunpack.c.0.s8 %v252
    %v254 = vlaneseq
    %v255 = vshrl.u32 %v254, 7
    %v256 = vsub.s32 %v253, %v255
    %v257 = vrot.slane %v242, %v256
    %v259 = vunpack.c.l.s4 1966171168
    %v260 = vunpack.c.0.s8 %v259
    %v261 = vlaneseq
    %v262 = vshrl.u32 %v261, 7
    %v263 = vsub.s32 %v260, %v262
    %v264 = vrot.slane %v241, %v263
    %v266 = vunpack.c.l.s4 1966171168
    %v267 = vunpack.c.0.s8 %v266
    %v268 = vlaneseq
    %v269 = vshrl.u32 %v268, 7
    %v270 = vsub.s32 %v267, %v269
    %v271 = vrot.slane %v243, %v270
    %v272 = vcombine.high %v250, %v250
    %v273 = vcombine.high %v257, %v257
    %v274 = vcombine.high %v264, %v264
    %v275 = vcombine.high %v271, %v271
    %v412 = vunpack.c.l.b16 %v70
    %v413 = vunpack.c.l.b16 %v71
    %v414 = vunpack.c.l.b16 %v72
    %v415 = vunpack.c.l.b16 %v73
    %v416 = vunpack.c.l.b16 %v74
    %v417 = vunpack.c.l.b16 %v75
    %v418 = vunpack.c.l.b16 %v76
    %v419 = vunpack.c.l.b16 %v77
    %v420 = vunpack.c.l.b16 %v78
    %v421 = vunpack.c.l.b16 %v79
    %v422 = vunpack.c.l.b16 %v80
    %v423 = vunpack.c.l.b16 %v81
    %v424 = vunpack.c.l.b16 %v82
    %v425 = vunpack.c.l.b16 %v83
    %v426 = vunpack.c.l.b16 %v84
    %v427 = vunpack.c.l.b16 %v85
    %v428 = vunpack.c.l.b16 %v86
    %v429 = vunpack.c.l.b16 %v87
    %v430 = vunpack.c.l.b16 %v88
    %v431 = vunpack.c.l.b16 %v89
    %v432 = vunpack.c.l.b16 %v90
    %v433 = vunpack.c.l.b16 %v91
    %v434 = vunpack.c.l.b16 %v92
    %v435 = vunpack.c.l.b16 %v93
    %v436 = vunpack.c.l.b16 %v94
    %v437 = vunpack.c.l.b16 %v95
    %v438 = vunpack.c.l.b16 %v96
    %v439 = vunpack.c.l.b16 %v97
    %v440 = vunpack.c.l.b16 %v98
    %v441 = vunpack.c.l.b16 %v99
    %v442 = vunpack.c.l.b16 %v100
    %v443 = vunpack.c.l.b16 %v101
    %v444 = vunpack.c.l.b16 %v102
    %v445 = vunpack.c.l.b16 %v103
    %v446 = vunpack.c.l.b16 %v104
    %v447 = vunpack.c.l.b16 %v105
    %v448 = vunpack.c.l.b16 %v106
    %v449 = vunpack.c.l.b16 %v107
    %v450 = vunpack.c.l.b16 %v108
    %v451 = vunpack.c.l.b16 %v109
    %v452 = vunpack.c.l.b16 %v110
    %v453 = vunpack.c.l.b16 %v111
    %v454 = vunpack.c.l.b16 %v112
    %v455 = vunpack.c.l.b16 %v113
    %v456 = vunpack.c.l.b16 %v114
    %v457 = vunpack.c.l.b16 %v115
    %v458 = vunpack.c.l.b16 %v116
    %v459 = vunpack.c.l.b16 %v117
    %v460 = vunpack.c.l.b16 %v118
    %v461 = vunpack.c.l.b16 %v119
    %v462 = vunpack.c.l.b16 %v120
    %v463 = vunpack.c.l.b16 %v121
    %v464 = vunpack.c.l.b16 %v122
    %v465 = vunpack.c.l.b16 %v123
    %v466 = vunpack.c.l.b16 %v124
    %v467 = vunpack.c.l.b16 %v125
    %v468 = vunpack.c.l.b16 %v126
    %v469 = vunpack.c.l.b16 %v127
    %v470 = vunpack.c.l.b16 %v128
    %v471 = vunpack.c.l.b16 %v129
    %v472 = vunpack.c.l.b16 %v130
    %v473 = vunpack.c.l.b16 %v131
    %v474 = vunpack.c.l.b16 %v132
    %v475 = vunpack.c.l.b16 %v133
    %v476 = vunpack.c.l.b16 %v134
    %v477 = vunpack.c.l.b16 %v135
    %v478 = vunpack.c.l.b16 %v136
    %v479 = vunpack.c.l.b16 %v137
    %v480 = vunpack.c.l.b16 %v138
    %v481 = vunpack.c.l.b16 %v139
    %v482 = vunpack.c.l.b16 %v140
    %v483 = vunpack.c.l.b16 %v141
    %v484 = vunpack.c.l.b16 %v142
    %v485 = vunpack.c.l.b16 %v143
    %v486 = vunpack.c.l.b16 %v144
    %v487 = vunpack.c.l.b16 %v145
    %v488 = vunpack.c.l.b16 %v146
    %v489 = vunpack.c.l.b16 %v147
    %v490 = vunpack.c.l.b16 %v148
    %v491 = vunpack.c.l.b16 %v149
    %v492 = vunpack.c.l.b16 %v150
    %v493 = vunpack.c.l.b16 %v151
    %v494 = vunpack.c.l.b16 %v152
    %v495 = vunpack.c.l.b16 %v153
    %v496 = vunpack.c.l.b16 %v154
    %v497 = vunpack.c.l.b16 %v155
    %v498 = vunpack.c.l.b16 %v156
    %v499 = vunpack.c.l.b16 %v157
    %v500 = vunpack.c.l.b16 %v158
    %v501 = vunpack.c.l.b16 %v159
    %v502 = vunpack.c.l.b16 %v160
    %v503 = vunpack.c.l.b16 %v161
    %v504 = vunpack.c.l.b16 %v162
    %v505 = vunpack.c.l.b16 %v163
    %v506 = vunpack.c.l.b16 %v164
    %v507 = vunpack.c.l.b16 %v165
    %v508 = vunpack.c.l.b16 %v166
    %v509 = vunpack.c.l.b16 %v167
    %v510 = vunpack.c.l.b16 %v168
    %v511 = vunpack.c.l.b16 %v169
    %v512 = vunpack.c.l.b16 %v170
    %v513 = vunpack.c.l.b16 %v171
    %v514 = vunpack.c.l.b16 %v172
    %v515 = vunpack.c.l.b16 %v173
    %v516 = vunpack.c.l.b16 %v174
    %v517 = vunpack.c.l.b16 %v175
    %v518 = vunpack.c.l.b16 %v176
    %v519 = vunpack.c.l.b16 %v177
    %v520 = vunpack.c.l.b16 %v178
    %v521 = vunpack.c.l.b16 %v179
    %v522 = vunpack.c.l.b16 %v180
    %v523 = vunpack.c.l.b16 %v181
    %v524 = vunpack.c.l.b16 %v182
    %v525 = vunpack.c.l.b16 %v183
    %v526 = vunpack.c.l.b16 %v184
    %v527 = vunpack.c.l.b16 %v185
    %v528 = vunpack.c.l.b16 %v186
    %v529 = vunpack.c.l.b16 %v187
    %v530 = vunpack.c.l.b16 %v188
    %v531 = vunpack.c.l.b16 %v189
    %v532 = vunpack.c.l.b16 %v190
    %v533 = vunpack.c.l.b16 %v191
    %v534 = vunpack.c.l.b16 %v192
    %v535 = vunpack.c.l.b16 %v193
    %v536 = vunpack.c.l.b16 %v194
    %v537 = vunpack.c.l.b16 %v195
    %v538 = vunpack.c.l.b16 %v196
    %v539 = vunpack.c.l.b16 %v197
    %v540 = vpack.c.b16 %v413, %v412
    %v541 = vpack.c.b16 %v415, %v414
    %v542 = vpack.c.b16 %v417, %v416
    %v543 = vpack.c.b16 %v419, %v418
    %v544 = vpack.c.b16 %v421, %v420
    %v545 = vpack.c.b16 %v423, %v422
    %v546 = vpack.c.b16 %v425, %v424
    %v547 = vpack.c.b16 %v427, %v426
    %v548 = vpack.c.b16 %v429, %v428
    %v549 = vpack.c.b16 %v431, %v430
    %v550 = vpack.c.b16 %v433, %v432
    %v551 = vpack.c.b16 %v435, %v434
    %v552 = vpack.c.b16 %v437, %v436
    %v553 = vpack.c.b16 %v439, %v438
    %v554 = vpack.c.b16 %v441, %v440
    %v555 = vpack.c.b16 %v443, %v442
    %v556 = vpack.c.b16 %v445, %v444
    %v557 = vpack.c.b16 %v447, %v446
    %v558 = vpack.c.b16 %v449, %v448
    %v559 = vpack.c.b16 %v451, %v450
    %v560 = vpack.c.b16 %v453, %v452
    %v561 = vpack.c.b16 %v455, %v454
    %v562 = vpack.c.b16 %v457, %v456
    %v563 = vpack.c.b16 %v459, %v458
    %v564 = vpack.c.b16 %v461, %v460
    %v565 = vpack.c.b16 %v463, %v462
    %v566 = vpack.c.b16 %v465, %v464
    %v567 = vpack.c.b16 %v467, %v466
    %v568 = vpack.c.b16 %v469, %v468
    %v569 = vpack.c.b16 %v471, %v470
    %v570 = vpack.c.b16 %v473, %v472
    %v571 = vpack.c.b16 %v475, %v474
    %v572 = vpack.c.b16 %v477, %v476
    %v573 = vpack.c.b16 %v479, %v478
    %v574 = vpack.c.b16 %v481, %v480
    %v575 = vpack.c.b16 %v483, %v482
    %v576 = vpack.c.b16 %v485, %v484
    %v577 = vpack.c.b16 %v487, %v486
    %v578 = vpack.c.b16 %v489, %v488
    %v579 = vpack.c.b16 %v491, %v490
    %v580 = vpack.c.b16 %v493, %v492
    %v581 = vpack.c.b16 %v495, %v494
    %v582 = vpack.c.b16 %v497, %v496
    %v583 = vpack.c.b16 %v499, %v498
    %v584 = vpack.c.b16 %v501, %v500
    %v585 = vpack.c.b16 %v503, %v502
    %v586 = vpack.c.b16 %v505, %v504
    %v587 = vpack.c.b16 %v507, %v506
    %v588 = vpack.c.b16 %v509, %v508
    %v589 = vpack.c.b16 %v511, %v510
    %v590 = vpack.c.b16 %v513, %v512
    %v591 = vpack.c.b16 %v515, %v514
    %v592 = vpack.c.b16 %v517, %v516
    %v593 = vpack.c.b16 %v519, %v518
    %v594 = vpack.c.b16 %v521, %v520
    %v595 = vpack.c.b16 %v523, %v522
    %v596 = vpack.c.b16 %v525, %v524
    %v597 = vpack.c.b16 %v527, %v526
    %v598 = vpack.c.b16 %v529, %v528
    %v599 = vpack.c.b16 %v531, %v530
    %v600 = vpack.c.b16 %v533, %v532
    %v601 = vpack.c.b16 %v535, %v534
    %v602 = vpack.c.b16 %v537, %v536
    %v603 = vpack.c.b16 %v539, %v538
    %668 = vmatprep.subr.bf16.mxu0 0
    %669 = vmatpush1.bf16.msra.mxu0 %v547
    %670 = vmatprep.subr.bf16.mxu0 0
    %671 = vmatpush1.bf16.msra.mxu0 %v546
    %672 = vmatprep.subr.bf16.mxu0 0
    %673 = vmatpush1.bf16.msra.mxu0 %v545
    %674 = vmatprep.subr.bf16.mxu0 0
    %675 = vmatpush1.bf16.msra.mxu0 %v544
    %676 = vmatprep.subr.bf16.mxu0 0
    %677 = vmatpush1.bf16.msra.mxu0 %v543
    %678 = vmatprep.subr.bf16.mxu0 0
    %679 = vmatpush1.bf16.msra.mxu0 %v542
    %680 = vmatprep.subr.bf16.mxu0 0
    %681 = vmatpush1.bf16.msra.mxu0 %v541
    %682 = vmatprep.subr.bf16.mxu0 0
    %683 = vmatpush1.bf16.msra.mxu0 %v540
    %684 = vmatprep.subr.bf16.mxu0 0
    %685 = vmatpush2.bf16.msra.mxu0 %v555
    %686 = vmatprep.subr.bf16.mxu0 0
    %687 = vmatpush2.bf16.msra.mxu0 %v554
    %688 = vmatprep.subr.bf16.mxu0 0
    %689 = vmatpush2.bf16.msra.mxu0 %v553
    %690 = vmatprep.subr.bf16.mxu0 0
    %691 = vmatpush2.bf16.msra.mxu0 %v552
    %692 = vmatprep.subr.bf16.mxu0 0
    %693 = vmatpush2.bf16.msra.mxu0 %v551
    %694 = vmatprep.subr.bf16.mxu0 0
    %695 = vmatpush2.bf16.msra.mxu0 %v550
    %696 = vmatprep.subr.bf16.mxu0 0
    %697 = vmatpush2.bf16.msra.mxu0 %v549
    %698 = vmatprep.subr.bf16.mxu0 0
    %699 = vmatpush2.bf16.msra.mxu0 %v548
    %700 = vmatprep.mubr.bf16.mxu0 %v264
    %701 = vmatmul.mubr.bf16.gmra.mxu0 %v250
    %v702 = vpop.f32.mrf.mxu0
    %v703 = vadd.f32 %v202, %v702
    %v704 = vpop.f32.mrf.mxu0
    %v705 = vpop.f32.mrf.mxu0
    %v706 = vpop.f32.mrf.mxu0
    %707 = vdwg.mxu0
    %708 = vmatprep.subr.bf16.mxu0 0
    %709 = vmatpush1.bf16.msra.mxu0 %v563
    %710 = vmatprep.subr.bf16.mxu0 0
    %711 = vmatpush1.bf16.msra.mxu0 %v562
    %712 = vmatprep.subr.bf16.mxu0 0
    %713 = vmatpush1.bf16.msra.mxu0 %v561
    %714 = vmatprep.subr.bf16.mxu0 0
    %715 = vmatpush1.bf16.msra.mxu0 %v560
    %716 = vmatprep.subr.bf16.mxu0 0
    %717 = vmatpush1.bf16.msra.mxu0 %v559
    %718 = vmatprep.subr.bf16.mxu0 0
    %719 = vmatpush1.bf16.msra.mxu0 %v558
    %720 = vmatprep.subr.bf16.mxu0 0
    %721 = vmatpush1.bf16.msra.mxu0 %v557
    %722 = vmatprep.subr.bf16.mxu0 0
    %723 = vmatpush1.bf16.msra.mxu0 %v556
    %724 = vmatprep.subr.bf16.mxu0 0
    %725 = vmatpush2.bf16.msra.mxu0 %v571
    %726 = vmatprep.subr.bf16.mxu0 0
    %727 = vmatpush2.bf16.msra.mxu0 %v570
    %728 = vmatprep.subr.bf16.mxu0 0
    %729 = vmatpush2.bf16.msra.mxu0 %v569
    %730 = vmatprep.subr.bf16.mxu0 0
    %731 = vmatpush2.bf16.msra.mxu0 %v568
    %732 = vmatprep.subr.bf16.mxu0 0
    %733 = vmatpush2.bf16.msra.mxu0 %v567
    %734 = vmatprep.subr.bf16.mxu0 0
    %735 = vmatpush2.bf16.msra.mxu0 %v566
    %736 = vmatprep.subr.bf16.mxu0 0
    %737 = vmatpush2.bf16.msra.mxu0 %v565
    %738 = vmatprep.subr.bf16.mxu0 0
    %739 = vmatpush2.bf16.msra.mxu0 %v564
    %740 = vmatprep.mubr.bf16.mxu0 %v274
    %741 = vmatmul.mubr.bf16.gmra.mxu0 %v272
    %v742 = vpop.f32.mrf.mxu0
    %v743 = vadd.f32 %v703, %v742
    %v744 = vpop.f32.mrf.mxu0
    %v745 = vpop.f32.mrf.mxu0
    %v746 = vpop.f32.mrf.mxu0
    %747 = vdwg.mxu0
    %748 = vmatprep.subr.bf16.mxu0 0
    %749 = vmatpush1.bf16.msra.mxu0 %v579
    %750 = vmatprep.subr.bf16.mxu0 0
    %751 = vmatpush1.bf16.msra.mxu0 %v578
    %752 = vmatprep.subr.bf16.mxu0 0
    %753 = vmatpush1.bf16.msra.mxu0 %v577
    %754 = vmatprep.subr.bf16.mxu0 0
    %755 = vmatpush1.bf16.msra.mxu0 %v576
    %756 = vmatprep.subr.bf16.mxu0 0
    %757 = vmatpush1.bf16.msra.mxu0 %v575
    %758 = vmatprep.subr.bf16.mxu0 0
    %759 = vmatpush1.bf16.msra.mxu0 %v574
    %760 = vmatprep.subr.bf16.mxu0 0
    %761 = vmatpush1.bf16.msra.mxu0 %v573
    %762 = vmatprep.subr.bf16.mxu0 0
    %763 = vmatpush1.bf16.msra.mxu0 %v572
    %764 = vmatprep.subr.bf16.mxu0 0
    %765 = vmatpush2.bf16.msra.mxu0 %v587
    %766 = vmatprep.subr.bf16.mxu0 0
    %767 = vmatpush2.bf16.msra.mxu0 %v586
    %768 = vmatprep.subr.bf16.mxu0 0
    %769 = vmatpush2.bf16.msra.mxu0 %v585
    %770 = vmatprep.subr.bf16.mxu0 0
    %771 = vmatpush2.bf16.msra.mxu0 %v584
    %772 = vmatprep.subr.bf16.mxu0 0
    %773 = vmatpush2.bf16.msra.mxu0 %v583
    %774 = vmatprep.subr.bf16.mxu0 0
    %775 = vmatpush2.bf16.msra.mxu0 %v582
    %776 = vmatprep.subr.bf16.mxu0 0
    %777 = vmatpush2.bf16.msra.mxu0 %v581
    %778 = vmatprep.subr.bf16.mxu0 0
    %779 = vmatpush2.bf16.msra.mxu0 %v580
    %780 = vmatprep.mubr.bf16.mxu0 %v271
    %781 = vmatmul.mubr.bf16.gmra.mxu0 %v257
    %v782 = vpop.f32.mrf.mxu0
    %v783 = vadd.f32 %v743, %v782
    %v784 = vpop.f32.mrf.mxu0
    %v785 = vpop.f32.mrf.mxu0
    %v786 = vpop.f32.mrf.mxu0
    %787 = vdwg.mxu0
    %788 = vmatprep.subr.bf16.mxu0 0
    %789 = vmatpush1.bf16.msra.mxu0 %v595
    %790 = vmatprep.subr.bf16.mxu0 0
    %791 = vmatpush1.bf16.msra.mxu0 %v594
    %792 = vmatprep.subr.bf16.mxu0 0
    %793 = vmatpush1.bf16.msra.mxu0 %v593
    %794 = vmatprep.subr.bf16.mxu0 0
    %795 = vmatpush1.bf16.msra.mxu0 %v592
    %796 = vmatprep.subr.bf16.mxu0 0
    %797 = vmatpush1.bf16.msra.mxu0 %v591
    %798 = vmatprep.subr.bf16.mxu0 0
    %799 = vmatpush1.bf16.msra.mxu0 %v590
    %800 = vmatprep.subr.bf16.mxu0 0
    %801 = vmatpush1.bf16.msra.mxu0 %v589
    %802 = vmatprep.subr.bf16.mxu0 0
    %803 = vmatpush1.bf16.msra.mxu0 %v588
    %804 = vmatprep.subr.bf16.mxu0 0
    %805 = vmatpush2.bf16.msra.mxu0 %v603
    %806 = vmatprep.subr.bf16.mxu0 0
    %807 = vmatpush2.bf16.msra.mxu0 %v602
    %808 = vmatprep.subr.bf16.mxu0 0
    %809 = vmatpush2.bf16.msra.mxu0 %v601
    %810 = vmatprep.subr.bf16.mxu0 0
    %811 = vmatpush2.bf16.msra.mxu0 %v600
    %812 = vmatprep.subr.bf16.mxu0 0
    %813 = vmatpush2.bf16.msra.mxu0 %v599
    %814 = vmatprep.subr.bf16.mxu0 0
    %815 = vmatpush2.bf16.msra.mxu0 %v598
    %816 = vmatprep.subr.bf16.mxu0 0
    %817 = vmatpush2.bf16.msra.mxu0 %v597
    %818 = vmatprep.subr.bf16.mxu0 0
    %819 = vmatpush2.bf16.msra.mxu0 %v596
    %820 = vmatprep.mubr.bf16.mxu0 %v275
    %821 = vmatmul.mubr.bf16.gmra.mxu0 %v273
    %v822 = vpop.f32.mrf.mxu0
    %v823 = vadd.f32 %v783, %v822
    %v824 = vpop.f32.mrf.mxu0
    %v825 = vpop.f32.mrf.mxu0
    %v826 = vpop.f32.mrf.mxu0
    %827 = vdwg.mxu0
    %v828 = vmax.f32 %v823, 0.0
    %v829 = vld [vmem:[%s3] sm:$0xff]
    %v830 = vld [vmem:[%s3 + $0x8] sm:$0xff]
    %v831 = vld [vmem:[%s3 + $0x10] sm:$0xff]
    %v832 = vld [vmem:[%s3 + $0x18] sm:$0xff]
    %v833 = vld [vmem:[%s3 + $0x20] sm:$0xff]
    %v834 = vld [vmem:[%s3 + $0x28] sm:$0xff]
    %v835 = vld [vmem:[%s3 + $0x30] sm:$0xff]
    %v836 = vld [vmem:[%s3 + $0x38] sm:$0xff]
    %v837 = vld [vmem:[%s3 + $0x40] sm:$0xff]
    %v838 = vld [vmem:[%s3 + $0x48] sm:$0xff]
    %v839 = vld [vmem:[%s3 + $0x50] sm:$0xff]
    %v840 = vld [vmem:[%s3 + $0x58] sm:$0xff]
    %v841 = vld [vmem:[%s3 + $0x60] sm:$0xff]
    %v842 = vld [vmem:[%s3 + $0x68] sm:$0xff]
    %v843 = vld [vmem:[%s3 + $0x70] sm:$0xff]
    %v844 = vld [vmem:[%s3 + $0x78] sm:$0xff]
    %v846 = vlaneseq
    %v847 = vshrl.u32 %v846, 7
    %v848 = vsub.s32 0, %v847
    %v849 = vrot.slane %v65, %v848
    %851 = vmatprep.subr.mxu0 0.0
    %852 = vmatpush1.msra.mxu0 %v844
    %853 = vmatprep.subr.mxu0 0.0
    %854 = vmatpush1.msra.mxu0 %v843
    %855 = vmatprep.subr.mxu0 0.0
    %856 = vmatpush1.msra.mxu0 %v842
    %857 = vmatprep.subr.mxu0 0.0
    %858 = vmatpush1.msra.mxu0 %v841
    %859 = vmatprep.subr.mxu0 0.0
    %860 = vmatpush1.msra.mxu0 %v840
    %861 = vmatprep.subr.mxu0 0.0
    %862 = vmatpush1.msra.mxu0 %v839
    %863 = vmatprep.subr.mxu0 0.0
    %864 = vmatpush1.msra.mxu0 %v838
    %865 = vmatprep.subr.mxu0 0.0
    %866 = vmatpush1.msra.mxu0 %v837
    %867 = vmatprep.subr.mxu0 0.0
    %868 = vmatpush1.msra.mxu0 %v836
    %869 = vmatprep.subr.mxu0 0.0
    %870 = vmatpush1.msra.mxu0 %v835
    %871 = vmatprep.subr.mxu0 0.0
    %872 = vmatpush1.msra.mxu0 %v834
    %873 = vmatprep.subr.mxu0 0.0
    %874 = vmatpush1.msra.mxu0 %v833
    %875 = vmatprep.subr.mxu0 0.0
    %876 = vmatpush1.msra.mxu0 %v832
    %877 = vmatprep.subr.mxu0 0.0
    %878 = vmatpush1.msra.mxu0 %v831
    %879 = vmatprep.subr.mxu0 0.0
    %880 = vmatpush1.msra.mxu0 %v830
    %881 = vmatprep.subr.mxu0 0.0
    %882 = vmatpush1.msra.mxu0 %v829
    %883 = vmatprep.subr.mxu0 0.0
    %884 = vmatpush2.msra.mxu0 0.0
    %885 = vmatprep.subr.mxu0 0.0
    %886 = vmatpush2.msra.mxu0 0.0
    %887 = vmatprep.subr.mxu0 0.0
    %888 = vmatpush2.msra.mxu0 0.0
    %889 = vmatprep.subr.mxu0 0.0
    %890 = vmatpush2.msra.mxu0 0.0
    %891 = vmatprep.subr.mxu0 0.0
    %892 = vmatpush2.msra.mxu0 0.0
    %893 = vmatprep.subr.mxu0 0.0
    %894 = vmatpush2.msra.mxu0 0.0
    %895 = vmatprep.subr.mxu0 0.0
    %896 = vmatpush2.msra.mxu0 0.0
    %897 = vmatprep.subr.mxu0 0.0
    %898 = vmatpush2.msra.mxu0 0.0
    %899 = vmatprep.subr.mxu0 0.0
    %900 = vmatpush2.msra.mxu0 0.0
    %901 = vmatprep.subr.mxu0 0.0
    %902 = vmatpush2.msra.mxu0 0.0
    %903 = vmatprep.subr.mxu0 0.0
    %904 = vmatpush2.msra.mxu0 0.0
    %905 = vmatprep.subr.mxu0 0.0
    %906 = vmatpush2.msra.mxu0 0.0
    %907 = vmatprep.subr.mxu0 0.0
    %908 = vmatpush2.msra.mxu0 0.0
    %909 = vmatprep.subr.mxu0 0.0
    %910 = vmatpush2.msra.mxu0 0.0
    %911 = vmatprep.subr.mxu0 0.0
    %912 = vmatpush2.msra.mxu0 0.0
    %913 = vmatprep.subr.mxu0 0.0
    %914 = vmatpush2.msra.mxu0 0.0
    %915 = vmatprep.mubr.f32.mxu0 0.0
    %916 = vmatmul.mubr.f32.gmra.mxu0 %v828
    %v917 = vpop.f32.mrf.mxu0
    %v918 = vadd.f32 %v849, %v917
    %v919 = vpop.f32.mrf.mxu0
    %920 = vdwg.mxu0
    %v921 = vmax.f32 %v918, 0.0
    %v922 = vld [vmem:[%s5] sm:$0xff]
    %v923 = vld [vmem:[%s5 + $0x8] sm:$0xff]
    %v924 = vld [vmem:[%s5 + $0x10] sm:$0xff]
    %v925 = vld [vmem:[%s5 + $0x18] sm:$0xff]
    %v926 = vld [vmem:[%s5 + $0x20] sm:$0xff]
    %v927 = vld [vmem:[%s5 + $0x28] sm:$0xff]
    %v928 = vld [vmem:[%s5 + $0x30] sm:$0xff]
    %v929 = vld [vmem:[%s5 + $0x38] sm:$0xff]
    %v931 = vlaneseq
    %v932 = vshrl.u32 %v931, 7
    %v933 = vsub.s32 0, %v932
    %v934 = vrot.slane %v66, %v933
    %vm936 = vcmask 523264
    %v938 = vsel %vm936, %v921, 0
    %940 = vmatprep.subr.mxu0 0.0
    %941 = vmatpush1.msra.mxu0 0.0
    %942 = vmatprep.subr.mxu0 0.0
    %943 = vmatpush1.msra.mxu0 0.0
    %944 = vmatprep.subr.mxu0 0.0
    %945 = vmatpush1.msra.mxu0 0.0
    %946 = vmatprep.subr.mxu0 0.0
    %947 = vmatpush1.msra.mxu0 0.0
    %948 = vmatprep.subr.mxu0 0.0
    %949 = vmatpush1.msra.mxu0 0.0
    %950 = vmatprep.subr.mxu0 0.0
    %951 = vmatpush1.msra.mxu0 0.0
    %952 = vmatprep.subr.mxu0 0.0
    %953 = vmatpush1.msra.mxu0 0.0
    %954 = vmatprep.subr.mxu0 0.0
    %955 = vmatpush1.msra.mxu0 0.0
    %956 = vmatprep.subr.mxu0 0.0
    %957 = vmatpush1.msra.mxu0 %v929
    %958 = vmatprep.subr.mxu0 0.0
    %959 = vmatpush1.msra.mxu0 %v928
    %960 = vmatprep.subr.mxu0 0.0
    %961 = vmatpush1.msra.mxu0 %v927
    %962 = vmatprep.subr.mxu0 0.0
    %963 = vmatpush1.msra.mxu0 %v926
    %964 = vmatprep.subr.mxu0 0.0
    %965 = vmatpush1.msra.mxu0 %v925
    %966 = vmatprep.subr.mxu0 0.0
    %967 = vmatpush1.msra.mxu0 %v924
    %968 = vmatprep.subr.mxu0 0.0
    %969 = vmatpush1.msra.mxu0 %v923
    %970 = vmatprep.subr.mxu0 0.0
    %971 = vmatpush1.msra.mxu0 %v922
    %972 = vmatprep.subr.mxu0 0.0
    %973 = vmatpush2.msra.mxu0 0.0
    %974 = vmatprep.subr.mxu0 0.0
    %975 = vmatpush2.msra.mxu0 0.0
    %976 = vmatprep.subr.mxu0 0.0
    %977 = vmatpush2.msra.mxu0 0.0
    %978 = vmatprep.subr.mxu0 0.0
    %979 = vmatpush2.msra.mxu0 0.0
    %980 = vmatprep.subr.mxu0 0.0
    %981 = vmatpush2.msra.mxu0 0.0
    %982 = vmatprep.subr.mxu0 0.0
    %983 = vmatpush2.msra.mxu0 0.0
    %984 = vmatprep.subr.mxu0 0.0
    %985 = vmatpush2.msra.mxu0 0.0
    %986 = vmatprep.subr.mxu0 0.0
    %987 = vmatpush2.msra.mxu0 0.0
    %988 = vmatprep.subr.mxu0 0.0
    %989 = vmatpush2.msra.mxu0 0.0
    %990 = vmatprep.subr.mxu0 0.0
    %991 = vmatpush2.msra.mxu0 0.0
    %992 = vmatprep.subr.mxu0 0.0
    %993 = vmatpush2.msra.mxu0 0.0
    %994 = vmatprep.subr.mxu0 0.0
    %995 = vmatpush2.msra.mxu0 0.0
    %996 = vmatprep.subr.mxu0 0.0
    %997 = vmatpush2.msra.mxu0 0.0
    %998 = vmatprep.subr.mxu0 0.0
    %999 = vmatpush2.msra.mxu0 0.0
    %1000 = vmatprep.subr.mxu0 0.0
    %1001 = vmatpush2.msra.mxu0 0.0
    %1002 = vmatprep.subr.mxu0 0.0
    %1003 = vmatpush2.msra.mxu0 0.0
    %1004 = vmatprep.mubr.f32.mxu0 0.0
    %1005 = vmatmul.mubr.f32.gmra.mxu0 %v938
    %v1006 = vpop.f32.mrf.mxu0
    %v1007 = vadd.f32 %v934, %v1006
    %v1008 = vpop.f32.mrf.mxu0
    %1009 = vdwg.mxu0
    %v1010 = vmax.f32 %v1007, 0.0
    %v1011 = vld [vmem:[%s7] sm:$0xff]
    %v1012 = vld [vmem:[%s7 + $0x8] sm:$0x3]
    %v1014 = vlaneseq
    %v1015 = vshrl.u32 %v1014, 7
    %v1016 = vsub.s32 0, %v1015
    %v1017 = vrot.slane %v67, %v1016
    %vm1019 = vcmask 80896
    %v1021 = vsel %vm1019, %v1010, 0
    %vm1023 = vcmask 1041408
    %v1025 = vsel %vm1023, %v1012, 0
    %1027 = vmatprep.subr.mxu0 0.0
    %1028 = vmatpush1.msra.mxu0 0.0
    %1029 = vmatprep.subr.mxu0 0.0
    %1030 = vmatpush1.msra.mxu0 0.0
    %1031 = vmatprep.subr.mxu0 0.0
    %1032 = vmatpush1.msra.mxu0 0.0
    %1033 = vmatprep.subr.mxu0 0.0
    %1034 = vmatpush1.msra.mxu0 0.0
    %1035 = vmatprep.subr.mxu0 0.0
    %1036 = vmatpush1.msra.mxu0 0.0
    %1037 = vmatprep.subr.mxu0 0.0
    %1038 = vmatpush1.msra.mxu0 0.0
    %1039 = vmatprep.subr.mxu0 0.0
    %1040 = vmatpush1.msra.mxu0 0.0
    %1041 = vmatprep.subr.mxu0 0.0
    %1042 = vmatpush1.msra.mxu0 0.0
    %1043 = vmatprep.subr.mxu0 0.0
    %1044 = vmatpush1.msra.mxu0 0.0
    %1045 = vmatprep.subr.mxu0 0.0
    %1046 = vmatpush1.msra.mxu0 0.0
    %1047 = vmatprep.subr.mxu0 0.0
    %1048 = vmatpush1.msra.mxu0 0.0
    %1049 = vmatprep.subr.mxu0 0.0
    %1050 = vmatpush1.msra.mxu0 0.0
    %1051 = vmatprep.subr.mxu0 0.0
    %1052 = vmatpush1.msra.mxu0 0.0
    %1053 = vmatprep.subr.mxu0 0.0
    %1054 = vmatpush1.msra.mxu0 0.0
    %1055 = vmatprep.subr.mxu0 0.0
    %1056 = vmatpush1.msra.mxu0 %v1025
    %1057 = vmatprep.subr.mxu0 0.0
    %1058 = vmatpush1.msra.mxu0 %v1011
    %1059 = vmatprep.subr.mxu0 0.0
    %1060 = vmatpush2.msra.mxu0 0.0
    %1061 = vmatprep.subr.mxu0 0.0
    %1062 = vmatpush2.msra.mxu0 0.0
    %1063 = vmatprep.subr.mxu0 0.0
    %1064 = vmatpush2.msra.mxu0 0.0
    %1065 = vmatprep.subr.mxu0 0.0
    %1066 = vmatpush2.msra.mxu0 0.0
    %1067 = vmatprep.subr.mxu0 0.0
    %1068 = vmatpush2.msra.mxu0 0.0
    %1069 = vmatprep.subr.mxu0 0.0
    %1070 = vmatpush2.msra.mxu0 0.0
    %1071 = vmatprep.subr.mxu0 0.0
    %1072 = vmatpush2.msra.mxu0 0.0
    %1073 = vmatprep.subr.mxu0 0.0
    %1074 = vmatpush2.msra.mxu0 0.0
    %1075 = vmatprep.subr.mxu0 0.0
    %1076 = vmatpush2.msra.mxu0 0.0
    %1077 = vmatprep.subr.mxu0 0.0
    %1078 = vmatpush2.msra.mxu0 0.0
    %1079 = vmatprep.subr.mxu0 0.0
    %1080 = vmatpush2.msra.mxu0 0.0
    %1081 = vmatprep.subr.mxu0 0.0
    %1082 = vmatpush2.msra.mxu0 0.0
    %1083 = vmatprep.subr.mxu0 0.0
    %1084 = vmatpush2.msra.mxu0 0.0
    %1085 = vmatprep.subr.mxu0 0.0
    %1086 = vmatpush2.msra.mxu0 0.0
    %1087 = vmatprep.subr.mxu0 0.0
    %1088 = vmatpush2.msra.mxu0 0.0
    %1089 = vmatprep.subr.mxu0 0.0
    %1090 = vmatpush2.msra.mxu0 0.0
    %1091 = vmatprep.mubr.f32.mxu0 0.0
    %1092 = vmatmul.mubr.f32.gmra.mxu0 %v1021
    %v1093 = vpop.f32.mrf.mxu0
    %v1094 = vadd.f32 %v1017, %v1093
    %v1095 = vpop.f32.mrf.mxu0
    %1096 = vdwg.mxu0
    %v1097 = vmax.f32 %v1094, 0.0
    %v1098 = vld [vmem:[%s9] sm:$0xff]
    %v1099 = vld [vmem:[%s9 + $0x8] sm:$0x3]
    %v1101 = vlaneseq
    %v1102 = vshrl.u32 %v1101, 7
    %v1103 = vsub.s32 0, %v1102
    %v1104 = vrot.slane %v68, %v1103
    %v1107 = vsel %vm1019, %v1097, 0
    %v1110 = vsel %vm1023, %v1099, 0
    %1112 = vmatprep.subr.mxu0 0.0
    %1113 = vmatpush1.msra.mxu0 0.0
    %1114 = vmatprep.subr.mxu0 0.0
    %1115 = vmatpush1.msra.mxu0 0.0
    %1116 = vmatprep.subr.mxu0 0.0
    %1117 = vmatpush1.msra.mxu0 0.0
    %1118 = vmatprep.subr.mxu0 0.0
    %1119 = vmatpush1.msra.mxu0 0.0
    %1120 = vmatprep.subr.mxu0 0.0
    %1121 = vmatpush1.msra.mxu0 0.0
    %1122 = vmatprep.subr.mxu0 0.0
    %1123 = vmatpush1.msra.mxu0 0.0
    %1124 = vmatprep.subr.mxu0 0.0
    %1125 = vmatpush1.msra.mxu0 0.0
    %1126 = vmatprep.subr.mxu0 0.0
    %1127 = vmatpush1.msra.mxu0 0.0
    %1128 = vmatprep.subr.mxu0 0.0
    %1129 = vmatpush1.msra.mxu0 0.0
    %1130 = vmatprep.subr.mxu0 0.0
    %1131 = vmatpush1.msra.mxu0 0.0
    %1132 = vmatprep.subr.mxu0 0.0
    %1133 = vmatpush1.msra.mxu0 0.0
    %1134 = vmatprep.subr.mxu0 0.0
    %1135 = vmatpush1.msra.mxu0 0.0
    %1136 = vmatprep.subr.mxu0 0.0
    %1137 = vmatpush1.msra.mxu0 0.0
    %1138 = vmatprep.subr.mxu0 0.0
    %1139 = vmatpush1.msra.mxu0 0.0
    %1140 = vmatprep.subr.mxu0 0.0
    %1141 = vmatpush1.msra.mxu0 %v1110
    %1142 = vmatprep.subr.mxu0 0.0
    %1143 = vmatpush1.msra.mxu0 %v1098
    %1144 = vmatprep.subr.mxu0 0.0
    %1145 = vmatpush2.msra.mxu0 0.0
    %1146 = vmatprep.subr.mxu0 0.0
    %1147 = vmatpush2.msra.mxu0 0.0
    %1148 = vmatprep.subr.mxu0 0.0
    %1149 = vmatpush2.msra.mxu0 0.0
    %1150 = vmatprep.subr.mxu0 0.0
    %1151 = vmatpush2.msra.mxu0 0.0
    %1152 = vmatprep.subr.mxu0 0.0
    %1153 = vmatpush2.msra.mxu0 0.0
    %1154 = vmatprep.subr.mxu0 0.0
    %1155 = vmatpush2.msra.mxu0 0.0
    %1156 = vmatprep.subr.mxu0 0.0
    %1157 = vmatpush2.msra.mxu0 0.0
    %1158 = vmatprep.subr.mxu0 0.0
    %1159 = vmatpush2.msra.mxu0 0.0
    %1160 = vmatprep.subr.mxu0 0.0
    %1161 = vmatpush2.msra.mxu0 0.0
    %1162 = vmatprep.subr.mxu0 0.0
    %1163 = vmatpush2.msra.mxu0 0.0
    %1164 = vmatprep.subr.mxu0 0.0
    %1165 = vmatpush2.msra.mxu0 0.0
    %1166 = vmatprep.subr.mxu0 0.0
    %1167 = vmatpush2.msra.mxu0 0.0
    %1168 = vmatprep.subr.mxu0 0.0
    %1169 = vmatpush2.msra.mxu0 0.0
    %1170 = vmatprep.subr.mxu0 0.0
    %1171 = vmatpush2.msra.mxu0 0.0
    %1172 = vmatprep.subr.mxu0 0.0
    %1173 = vmatpush2.msra.mxu0 0.0
    %1174 = vmatprep.subr.mxu0 0.0
    %1175 = vmatpush2.msra.mxu0 0.0
    %1176 = vmatprep.mubr.f32.mxu0 0.0
    %1177 = vmatmul.mubr.f32.gmra.mxu0 %v1107
    %v1178 = vpop.f32.mrf.mxu0
    %v1179 = vadd.f32 %v1104, %v1178
    %v1180 = vpop.f32.mrf.mxu0
    %1181 = vdwg.mxu0
    %v1182 = vmax.f32 %v1179, 0.0
    %v1183 = vld [vmem:[%s11] sm:$0xff]
    %v1184 = vld [vmem:[%s11 + $0x8] sm:$0x3]
    %v1186 = vlaneseq
    %v1187 = vshrl.u32 %v1186, 7
    %v1188 = vsub.s32 0, %v1187
    %v1189 = vrot.slane %v69, %v1188
    %v1192 = vsel %vm1019, %v1182, 0
    %v1195 = vsel %vm1023, %v1184, 0
    %1197 = vmatprep.subr.mxu0 0.0
    %1198 = vmatpush1.msra.mxu0 0.0
    %1199 = vmatprep.subr.mxu0 0.0
    %1200 = vmatpush1.msra.mxu0 0.0
    %1201 = vmatprep.subr.mxu0 0.0
    %1202 = vmatpush1.msra.mxu0 0.0
    %1203 = vmatprep.subr.mxu0 0.0
    %1204 = vmatpush1.msra.mxu0 0.0
    %1205 = vmatprep.subr.mxu0 0.0
    %1206 = vmatpush1.msra.mxu0 0.0
    %1207 = vmatprep.subr.mxu0 0.0
    %1208 = vmatpush1.msra.mxu0 0.0
    %1209 = vmatprep.subr.mxu0 0.0
    %1210 = vmatpush1.msra.mxu0 0.0
    %1211 = vmatprep.subr.mxu0 0.0
    %1212 = vmatpush1.msra.mxu0 0.0
    %1213 = vmatprep.subr.mxu0 0.0
    %1214 = vmatpush1.msra.mxu0 0.0
    %1215 = vmatprep.subr.mxu0 0.0
    %1216 = vmatpush1.msra.mxu0 0.0
    %1217 = vmatprep.subr.mxu0 0.0
    %1218 = vmatpush1.msra.mxu0 0.0
    %1219 = vmatprep.subr.mxu0 0.0
    %1220 = vmatpush1.msra.mxu0 0.0
    %1221 = vmatprep.subr.mxu0 0.0
    %1222 = vmatpush1.msra.mxu0 0.0
    %1223 = vmatprep.subr.mxu0 0.0
    %1224 = vmatpush1.msra.mxu0 0.0
    %1225 = vmatprep.subr.mxu0 0.0
    %1226 = vmatpush1.msra.mxu0 %v1195
    %1227 = vmatprep.subr.mxu0 0.0
    %1228 = vmatpush1.msra.mxu0 %v1183
    %1229 = vmatprep.subr.mxu0 0.0
    %1230 = vmatpush2.msra.mxu0 0.0
    %1231 = vmatprep.subr.mxu0 0.0
    %1232 = vmatpush2.msra.mxu0 0.0
    %1233 = vmatprep.subr.mxu0 0.0
    %1234 = vmatpush2.msra.mxu0 0.0
    %1235 = vmatprep.subr.mxu0 0.0
    %1236 = vmatpush2.msra.mxu0 0.0
    %1237 = vmatprep.subr.mxu0 0.0
    %1238 = vmatpush2.msra.mxu0 0.0
    %1239 = vmatprep.subr.mxu0 0.0
    %1240 = vmatpush2.msra.mxu0 0.0
    %1241 = vmatprep.subr.mxu0 0.0
    %1242 = vmatpush2.msra.mxu0 0.0
    %1243 = vmatprep.subr.mxu0 0.0
    %1244 = vmatpush2.msra.mxu0 0.0
    %1245 = vmatprep.subr.mxu0 0.0
    %1246 = vmatpush2.msra.mxu0 0.0
    %1247 = vmatprep.subr.mxu0 0.0
    %1248 = vmatpush2.msra.mxu0 0.0
    %1249 = vmatprep.subr.mxu0 0.0
    %1250 = vmatpush2.msra.mxu0 0.0
    %1251 = vmatprep.subr.mxu0 0.0
    %1252 = vmatpush2.msra.mxu0 0.0
    %1253 = vmatprep.subr.mxu0 0.0
    %1254 = vmatpush2.msra.mxu0 0.0
    %1255 = vmatprep.subr.mxu0 0.0
    %1256 = vmatpush2.msra.mxu0 0.0
    %1257 = vmatprep.subr.mxu0 0.0
    %1258 = vmatpush2.msra.mxu0 0.0
    %1259 = vmatprep.subr.mxu0 0.0
    %1260 = vmatpush2.msra.mxu0 0.0
    %1261 = vmatprep.mubr.f32.mxu0 0.0
    %1262 = vmatmul.mubr.f32.gmra.mxu0 %v1192
    %v1263 = vpop.f32.mrf.mxu0
    %v1264 = vadd.f32 %v1189, %v1263
    %v1265 = vpop.f32.mrf.mxu0
    %1266 = vdwg.mxu0
    %v1267 = vsel %vm1019, %v1264, -inf
    %1268 = vmax.xlane.f32.xlu0 %v1267
    %v1269 = vpop.xlane.xlu0 %1268
    %v1270 = vsub.f32 %v1264, %v1269
    %v1271 = vmul.f32 %v1270, 1.442695
    %v1272 = vpow.pop %v1271
    %v1273 = vsel %vm1019, %v1272, 0.0
    %1274 = vadd.xlane.f32.xlu0 %v1273
    %v1275 = vpop.xlane.xlu0 %1274
    %v1276 = vlog2.pop %v1275
    %v1277 = vmul.f32 %v1276, 0.6931472
    %v1278 = vsub.f32 %v1270, %v1277
    %1279 = vst.msk [vmem:[#allocation5] sm:$0xff] %vm1019, %v1278
    // Predicated region
    $region58: #{tpu_custom_call.1} parent=1 // pred_check
      _
    $region59: #{tpu_custom_call.1} parent=1 // pred_check_branch
      %1281 = sbr.rel (0) target = $region61
    $region60: #{tpu_custom_call.1} parent=1 // pred_region
      %s1283 = ssub.s32 128, 32
      %1284 = vsyncadd [#allocation4], %s1283
      %s1285 = sshll.u32 [#allocation5], 4
      %s1286 = int_to_ptr.vmem [resolvable:$true] %s1285
      %1291 = dma.vmem_to_hbm [thread:$0]  %s1286, 32, %s13, [#allocation4], 32, 32, 2
    $region61: #{tpu_custom_call.1} parent=1 // pred_fallthru
      _
    // Predicated region
    $region62: #{tpu_custom_call.1} parent=1 // pred_check
      _
    $region63: #{tpu_custom_call.1} parent=1 // pred_check_branch
      %1293 = sbr.rel (0) target = $region65
    $region64: #{tpu_custom_call.1} parent=1 // pred_region
      %1294 = dma.done [#allocation4], 128
    $region65: #{tpu_custom_call.1} parent=1 // pred_fallthru
      _
    %1295 = vsyncpa [#allocation3], 1
    %1296 = vsyncpa [#allocation4], 1

</llo_original>
